<compile_context>
chip_gen: v5e
topology: v5e:2x2
jax: 0.10.0
libtpu: 0.0.40
codegen_flags: <defaults>
</compile_context>

<pallas_src>
import functools

import jax
import jax.numpy as jnp
from jax import lax
from jax.experimental import pallas as pl
from jax.experimental.pallas import tpu as pltpu


def _yolo_kernel(gxy_ref, p_ref, io_ref, *, stride, anchors, na, no, head):
    """Decode one (batch, spatial-tile) block for all `na` anchors.

    gxy_ref : VMEM (2, tile) f32          rows: (gx-0.5)*stride, (gy-0.5)*stride
    p_ref   : VMEM (1, na, no, tile)      raw conv output block (native dtype)
    io_ref  : VMEM (1, na, no, tile)      decoded output block
    """
    # Hoisted per-grid-step constants over the channel (sublane) axis.
    ch = lax.broadcasted_iota(jnp.int32, (head, 1), 0)
    # Linear coefficient per channel row: 2*stride for x/y, 0 for w/h, 1 for obj/cls.
    lin = jnp.where(ch < 2, 2.0 * stride, jnp.where(ch < 4, 0.0, 1.0))
    # Additive term: (gx-0.5)*stride on row 0, (gy-0.5)*stride on row 1, 0 elsewhere.
    add = jnp.where(ch == 0, gxy_ref[0:1, :],
                    jnp.where(ch == 1, gxy_ref[1:2, :], 0.0))

    for a in range(na):                               # static unroll, na is tiny (e.g. 3)
        aw, ah = anchors[a]
        # Quadratic coefficient: (2s)^2*anchor_vec*stride == 4*anchor*s^2 (stride cancels).
        quad = jnp.where(ch == 2, 4.0 * aw, jnp.where(ch == 3, 4.0 * ah, 0.0))

        # Box/obj/first-class channels: fused decode, single full-tile store.
        x = p_ref[0, a, 0:head, :].astype(jnp.float32)
        s = jnp.tanh(x * 0.5) * 0.5 + 0.5             # sigmoid, one EUP push
        io_ref[0, a, 0:head, :] = (s * (lin + s * quad) + add).astype(io_ref.dtype)

        # Remaining class channels (only when no > 8): plain sigmoid, no decode math.
        if head < no:
            xt = p_ref[0, a, head:, :].astype(jnp.float32)
            io_ref[0, a, head:, :] = (jnp.tanh(xt * 0.5) * 0.5 + 0.5).astype(io_ref.dtype)


def yolo_forward(p_nchw, anchors, stride, *, return_p=False, out_dtype=None,
                 tile_lanes=2048):
    """p_nchw: (bs, na*no, ny, nx) in its native dtype (f32 or bf16).

    Returns (io, p) matching YOLOLayer.forward:
      io : (bs, na*ny*nx, no)
      p  : (bs, na, ny, nx, no) raw permuted predictions (None unless return_p=True).
    """
    anchors = tuple((float(w), float(h)) for (w, h) in anchors)
    na = len(anchors)
    bs, c, ny, nx = p_nchw.shape
    no = c // na
    nynx = ny * nx
    stride = float(stride)
    out_dtype = p_nchw.dtype if out_dtype is None else jnp.dtype(out_dtype)

    # Reshape only — no dtype cast, no pad (zero extra HBM passes).
    p_flat = p_nchw.reshape(bs, na, no, nynx)

    # Spatial tiling: a 128-multiple tile when the plane is large (gives v7x a
    # second parallel axis + pipeline overlap); otherwise one full-extent block
    # (exempt from the 128 rule; at most one masked tail vst).
    tile = int(tile_lanes) if nynx > int(tile_lanes) else nynx
    num_sp = pl.cdiv(nynx, tile)

    # Grid offsets with -0.5 and *stride folded in, built from iota (no HBM
    # re-read of the big tensor).  Padded to num_sp*tile so gxy blocks are
    # always in-bounds; out-of-range lanes are never written back for p/io.
    gl = num_sp * tile
    idx = jnp.arange(gl, dtype=jnp.int32)
    gx = (idx % nx).astype(jnp.float32)
    gy = (idx // nx).astype(jnp.float32)
    gxy = jnp.stack(((gx - 0.5) * stride, (gy - 0.5) * stride), axis=0)  # (2, gl)

    head = min(no, 8)  # first sublane tile: box(4) + obj(1) + first classes
    kernel = functools.partial(_yolo_kernel, stride=stride, anchors=anchors,
                               na=na, no=no, head=head)

    # Derive a VMEM budget from the real double-buffered block bytes; only pass
    # it when it exceeds v5e's 16 MiB scoped default, and keep headroom below
    # v7x's 64 MiB physical VMEM.
    blk_in = na * no * tile * p_flat.dtype.itemsize
    blk_out = na * no * tile * jnp.dtype(out_dtype).itemsize
    blk_gxy = 2 * tile * 4
    needed = 2 * (blk_in + blk_out + blk_gxy) + (2 << 20)
    vmem_limit = None
    if needed > (16 << 20):
        vmem_limit = min(needed + (8 << 20), 56 << 20)

    io_flat = pl.pallas_call(
        kernel,
        out_shape=jax.ShapeDtypeStruct((bs, na, no, nynx), out_dtype),
        grid_spec=pltpu.PrefetchScalarGridSpec(
            num_scalar_prefetch=0,
            grid=(bs, num_sp),
            in_specs=[
                pl.BlockSpec((2, tile), lambda b, t: (0, t)),                # gxy
                pl.BlockSpec((1, na, no, tile), lambda b, t: (b, 0, 0, t)),  # p
            ],
            out_specs=pl.BlockSpec((1, na, no, tile), lambda b, t: (b, 0, 0, t)),
        ),
        compiler_params=pltpu.CompilerParams(
            dimension_semantics=("parallel", "parallel"),
            vmem_limit_bytes=vmem_limit,
        ),
    )(gxy, p_flat)

    # Layout glue required by the module semantics (permute(0,1,3,4,2) + view);
    # pure data movement left to XLA — fuse into the consumer where possible.
    io = io_flat.reshape(bs, na, no, ny, nx).transpose(0, 1, 3, 4, 2)
    io_out = io.reshape(bs, na * ny * nx, no)

    p_out = None
    if return_p:
        # Raw (pre-sigmoid) permuted predictions; skipped by default on inference.
        p_out = p_nchw.reshape(bs, na, no, ny, nx).transpose(0, 1, 3, 4, 2)
    return io_out, p_out


def yolo_reference(p_nchw, anchors, stride):
    """Pure-JAX transcription of the PyTorch forward for validation."""
    anchors = jnp.asarray(anchors, dtype=jnp.float32)
    na = anchors.shape[0]
    bs, c, ny, nx = p_nchw.shape
    no = c // na
    p5 = p_nchw.reshape(bs, na, no, ny, nx).transpose(0, 1, 3, 4, 2)
    io = jax.nn.sigmoid(p5.astype(jnp.float32))
    yv, xv = jnp.meshgrid(jnp.arange(ny), jnp.arange(nx), indexing="ij")
    grid = jnp.stack((xv, yv), 2).reshape(1, 1, ny, nx, 2).astype(jnp.float32)
    anchor_wh = (anchors / stride).reshape(1, na, 1, 1, 2)
    xy = (io[..., :2] * 2.0 - 0.5 + grid) * stride
    wh = ((io[..., 2:4] * 2.0) ** 2) * anchor_wh * stride
    io = jnp.concatenate([xy, wh, io[..., 4:]], axis=-1)
    return io.reshape(bs, -1, no), p5


if __name__ == "__main__":
    anchors = [(10.0, 13.0), (16.0, 30.0), (33.0, 23.0)]   # na = 3
    na = len(anchors)

    # ---- Config A: f32 input, 16x16 plane (lane-aligned), no = 8 (head == no),
    #      single full-extent spatial block, p also returned & checked. ----
    nc, stride, bs, ny, nx = 3, 8, 2, 16, 16
    no = nc + 5
    key = jax.random.PRNGKey(0)
    p = jax.random.normal(key, (bs, na * no, ny, nx), dtype=jnp.float32)

    fwd = jax.jit(functools.partial(yolo_forward, anchors=anchors, stride=stride,
                                    return_p=True))
    io_k, p_k = fwd(p)
    jax.block_until_ready((io_k, p_k))

    io_r, p_r = yolo_reference(p, anchors, stride)
    jax.block_until_ready((io_r, p_r))

    assert io_k.shape == (bs, na * ny * nx, no)
    assert p_k.shape == (bs, na, ny, nx, no)
    assert jnp.allclose(io_k, io_r, atol=2e-3, rtol=1e-4)
    assert jnp.allclose(p_k, p_r, atol=1e-6, rtol=1e-6)

    # ---- Config B: bf16 input, 13x13 plane (not a multiple of 128), no = 20
    #      (exercises the plain-sigmoid class tail), spatial tiling with a
    #      partial last block (tile_lanes=128), f32 decode output. ----
    nc2, stride2, bs2, ny2, nx2 = 15, 16, 1, 13, 13
    no2 = nc2 + 5
    p2 = jax.random.normal(jax.random.PRNGKey(0),
                           (bs2, na * no2, ny2, nx2), dtype=jnp.float32).astype(jnp.bfloat16)

    fwd2 = jax.jit(functools.partial(yolo_forward, anchors=anchors, stride=stride2,
                                     out_dtype=jnp.float32, tile_lanes=128))
    io_k2, _ = fwd2(p2)
    jax.block_until_ready(io_k2)

    io_r2, _ = yolo_reference(p2.astype(jnp.float32), anchors, stride2)
    jax.block_until_ready(io_r2)

    assert io_k2.shape == (bs2, na * ny2 * nx2, no2)
    assert jnp.allclose(io_k2, io_r2, atol=5e-3, rtol=1e-3)

    print("KERNEL_OK")
</pallas_src>

<mosaic_0001>
module attributes {stable_mosaic.version = 11 : i64} {
  func.func @_yolo_kernel(%arg0: i32, %arg1: i32, %arg2: memref<2x256xf32, #tpu.memory_space<vmem>>, %arg3: memref<1x3x8x256xf32, #tpu.memory_space<vmem>>, %arg4: memref<1x3x8x256xf32, #tpu.memory_space<vmem>>) attributes {dimension_semantics = [#tpu.dimension_semantics<parallel>, #tpu.dimension_semantics<parallel>], iteration_bounds = array<i64: 2, 1>, scalar_prefetch = 0 : i64, scratch_operands = 0 : i64, tpu.core_type = #tpu.core_type<tc>, window_params = [{transform_indices = @transform_0, window_bounds = array<i64: 2, 256>}, {transform_indices = @transform_1, window_bounds = array<i64: 1, 3, 8, 256>}, {transform_indices = @transform_2, window_bounds = array<i64: 1, 3, 8, 256>}]} {
    %0 = tpu.iota {dimensions = array<i32: 0>} : vector<8x1xi32>
    %c2_i32 = arith.constant 2 : i32
    %1 = vector.broadcast %c2_i32 : i32 to vector<8x1xi32>
    %2 = arith.cmpi slt, %0, %1 : vector<8x1xi32>
    %c4_i32 = arith.constant 4 : i32
    %3 = vector.broadcast %c4_i32 : i32 to vector<8x1xi32>
    %4 = arith.cmpi slt, %0, %3 : vector<8x1xi32>
    %cst = arith.constant 0.000000e+00 : f32
    %cst_0 = arith.constant 1.000000e+00 : f32
    %5 = vector.broadcast %cst : f32 to vector<8x1xf32>
    %6 = vector.broadcast %cst_0 : f32 to vector<8x1xf32>
    %7 = arith.select %4, %5, %6 : vector<8x1xi1>, vector<8x1xf32>
    %cst_1 = arith.constant 1.600000e+01 : f32
    %8 = vector.broadcast %cst_1 : f32 to vector<8x1xf32>
    %9 = arith.select %2, %8, %7 : vector<8x1xi1>, vector<8x1xf32>
    %c0_i32 = arith.constant 0 : i32
    %10 = vector.broadcast %c0_i32 : i32 to vector<8x1xi32>
    %11 = arith.cmpi eq, %0, %10 : vector<8x1xi32>
    %c0 = arith.constant 0 : index
    %c0_2 = arith.constant 0 : index
    %12 = vector.load %arg2[%c0, %c0_2] : memref<2x256xf32, #tpu.memory_space<vmem>>, vector<1x256xf32>
    %c1_i32 = arith.constant 1 : i32
    %13 = vector.broadcast %c1_i32 : i32 to vector<8x1xi32>
    %14 = arith.cmpi eq, %0, %13 : vector<8x1xi32>
    %c1 = arith.constant 1 : index
    %c0_3 = arith.constant 0 : index
    %15 = vector.load %arg2[%c1, %c0_3] : memref<2x256xf32, #tpu.memory_space<vmem>>, vector<1x256xf32>
    %cst_4 = arith.constant 0.000000e+00 : f32
    %16 = vector.shape_cast %14 : vector<8x1xi1> to vector<8x1xi1>
    %17 = vector.broadcast %16 : vector<8x1xi1> to vector<8x256xi1>
    %18 = vector.shape_cast %15 : vector<1x256xf32> to vector<1x256xf32>
    %19 = vector.broadcast %18 : vector<1x256xf32> to vector<8x256xf32>
    %20 = vector.broadcast %cst_4 : f32 to vector<8x256xf32>
    %21 = arith.select %17, %19, %20 : vector<8x256xi1>, vector<8x256xf32>
    %22 = vector.shape_cast %11 : vector<8x1xi1> to vector<8x1xi1>
    %23 = vector.broadcast %22 : vector<8x1xi1> to vector<8x256xi1>
    %24 = vector.shape_cast %12 : vector<1x256xf32> to vector<1x256xf32>
    %25 = vector.broadcast %24 : vector<1x256xf32> to vector<8x256xf32>
    %26 = arith.select %23, %25, %21 : vector<8x256xi1>, vector<8x256xf32>
    %c2_i32_5 = arith.constant 2 : i32
    %27 = vector.broadcast %c2_i32_5 : i32 to vector<8x1xi32>
    %28 = arith.cmpi eq, %0, %27 : vector<8x1xi32>
    %c3_i32 = arith.constant 3 : i32
    %29 = vector.broadcast %c3_i32 : i32 to vector<8x1xi32>
    %30 = arith.cmpi eq, %0, %29 : vector<8x1xi32>
    %cst_6 = arith.constant 5.200000e+01 : f32
    %cst_7 = arith.constant 0.000000e+00 : f32
    %31 = vector.broadcast %cst_6 : f32 to vector<8x1xf32>
    %32 = vector.broadcast %cst_7 : f32 to vector<8x1xf32>
    %33 = arith.select %30, %31, %32 : vector<8x1xi1>, vector<8x1xf32>
    %cst_8 = arith.constant 4.000000e+01 : f32
    %34 = vector.broadcast %cst_8 : f32 to vector<8x1xf32>
    %35 = arith.select %28, %34, %33 : vector<8x1xi1>, vector<8x1xf32>
    %c0_9 = arith.constant 0 : index
    %c0_10 = arith.constant 0 : index
    %c0_11 = arith.constant 0 : index
    %c0_12 = arith.constant 0 : index
    %36 = vector.load %arg3[%c0_9, %c0_10, %c0_11, %c0_12] : memref<1x3x8x256xf32, #tpu.memory_space<vmem>>, vector<1x1x8x256xf32>
    %37 = vector.shape_cast %36 : vector<1x1x8x256xf32> to vector<8x256xf32>
    %cst_13 = arith.constant 5.000000e-01 : f32
    %38 = vector.broadcast %cst_13 : f32 to vector<8x256xf32>
    %39 = arith.mulf %37, %38 : vector<8x256xf32>
    %40 = math.tanh %39 : vector<8x256xf32>
    %cst_14 = arith.constant 5.000000e-01 : f32
    %41 = vector.broadcast %cst_14 : f32 to vector<8x256xf32>
    %42 = arith.mulf %40, %41 : vector<8x256xf32>
    %cst_15 = arith.constant 5.000000e-01 : f32
    %43 = vector.broadcast %cst_15 : f32 to vector<8x256xf32>
    %44 = arith.addf %42, %43 : vector<8x256xf32>
    %45 = vector.broadcast %35 : vector<8x1xf32> to vector<8x256xf32>
    %46 = arith.mulf %44, %45 : vector<8x256xf32>
    %47 = vector.broadcast %9 : vector<8x1xf32> to vector<8x256xf32>
    %48 = arith.addf %47, %46 : vector<8x256xf32>
    %49 = arith.mulf %44, %48 : vector<8x256xf32>
    %50 = arith.addf %49, %26 : vector<8x256xf32>
    %c0_16 = arith.constant 0 : index
    %c0_17 = arith.constant 0 : index
    %c0_18 = arith.constant 0 : index
    %c0_19 = arith.constant 0 : index
    %51 = vector.load %arg4[%c0_16, %c0_17, %c0_18, %c0_19] : memref<1x3x8x256xf32, #tpu.memory_space<vmem>>, vector<1x1x8x256xf32>
    %52 = vector.shape_cast %51 : vector<1x1x8x256xf32> to vector<8x256xf32>
    %53 = vector.shape_cast %50 : vector<8x256xf32> to vector<1x1x8x256xf32>
    tpu.vector_store %arg4[%c0_16, %c0_17, %c0_18, %c0_19], %53 {strides = array<i32>} : memref<1x3x8x256xf32, #tpu.memory_space<vmem>>, vector<1x1x8x256xf32>,
    %c2_i32_20 = arith.constant 2 : i32
    %54 = vector.broadcast %c2_i32_20 : i32 to vector<8x1xi32>
    %55 = arith.cmpi eq, %0, %54 : vector<8x1xi32>
    %c3_i32_21 = arith.constant 3 : i32
    %56 = vector.broadcast %c3_i32_21 : i32 to vector<8x1xi32>
    %57 = arith.cmpi eq, %0, %56 : vector<8x1xi32>
    %cst_22 = arith.constant 1.200000e+02 : f32
    %cst_23 = arith.constant 0.000000e+00 : f32
    %58 = vector.broadcast %cst_22 : f32 to vector<8x1xf32>
    %59 = vector.broadcast %cst_23 : f32 to vector<8x1xf32>
    %60 = arith.select %57, %58, %59 : vector<8x1xi1>, vector<8x1xf32>
    %cst_24 = arith.constant 6.400000e+01 : f32
    %61 = vector.broadcast %cst_24 : f32 to vector<8x1xf32>
    %62 = arith.select %55, %61, %60 : vector<8x1xi1>, vector<8x1xf32>
    %c0_25 = arith.constant 0 : index
    %c1_26 = arith.constant 1 : index
    %c0_27 = arith.constant 0 : index
    %c0_28 = arith.constant 0 : index
    %63 = vector.load %arg3[%c0_25, %c1_26, %c0_27, %c0_28] : memref<1x3x8x256xf32, #tpu.memory_space<vmem>>, vector<1x1x8x256xf32>
    %64 = vector.shape_cast %63 : vector<1x1x8x256xf32> to vector<8x256xf32>
    %cst_29 = arith.constant 5.000000e-01 : f32
    %65 = vector.broadcast %cst_29 : f32 to vector<8x256xf32>
    %66 = arith.mulf %64, %65 : vector<8x256xf32>
    %67 = math.tanh %66 : vector<8x256xf32>
    %cst_30 = arith.constant 5.000000e-01 : f32
    %68 = vector.broadcast %cst_30 : f32 to vector<8x256xf32>
    %69 = arith.mulf %67, %68 : vector<8x256xf32>
    %cst_31 = arith.constant 5.000000e-01 : f32
    %70 = vector.broadcast %cst_31 : f32 to vector<8x256xf32>
    %71 = arith.addf %69, %70 : vector<8x256xf32>
    %72 = vector.broadcast %62 : vector<8x1xf32> to vector<8x256xf32>
    %73 = arith.mulf %71, %72 : vector<8x256xf32>
    %74 = vector.broadcast %9 : vector<8x1xf32> to vector<8x256xf32>
    %75 = arith.addf %74, %73 : vector<8x256xf32>
    %76 = arith.mulf %71, %75 : vector<8x256xf32>
    %77 = arith.addf %76, %26 : vector<8x256xf32>
    %c0_32 = arith.constant 0 : index
    %c1_33 = arith.constant 1 : index
    %c0_34 = arith.constant 0 : index
    %c0_35 = arith.constant 0 : index
    %78 = vector.load %arg4[%c0_32, %c1_33, %c0_34, %c0_35] : memref<1x3x8x256xf32, #tpu.memory_space<vmem>>, vector<1x1x8x256xf32>
    %79 = vector.shape_cast %78 : vector<1x1x8x256xf32> to vector<8x256xf32>
    %80 = vector.shape_cast %77 : vector<8x256xf32> to vector<1x1x8x256xf32>
    tpu.vector_store %arg4[%c0_32, %c1_33, %c0_34, %c0_35], %80 {strides = array<i32>} : memref<1x3x8x256xf32, #tpu.memory_space<vmem>>, vector<1x1x8x256xf32>,
    %c2_i32_36 = arith.constant 2 : i32
    %81 = vector.broadcast %c2_i32_36 : i32 to vector<8x1xi32>
    %82 = arith.cmpi eq, %0, %81 : vector<8x1xi32>
    %c3_i32_37 = arith.constant 3 : i32
    %83 = vector.broadcast %c3_i32_37 : i32 to vector<8x1xi32>
    %84 = arith.cmpi eq, %0, %83 : vector<8x1xi32>
    %cst_38 = arith.constant 9.200000e+01 : f32
    %cst_39 = arith.constant 0.000000e+00 : f32
    %85 = vector.broadcast %cst_38 : f32 to vector<8x1xf32>
    %86 = vector.broadcast %cst_39 : f32 to vector<8x1xf32>
    %87 = arith.select %84, %85, %86 : vector<8x1xi1>, vector<8x1xf32>
    %cst_40 = arith.constant 1.320000e+02 : f32
    %88 = vector.broadcast %cst_40 : f32 to vector<8x1xf32>
    %89 = arith.select %82, %88, %87 : vector<8x1xi1>, vector<8x1xf32>
    %c0_41 = arith.constant 0 : index
    %c2 = arith.constant 2 : index
    %c0_42 = arith.constant 0 : index
    %c0_43 = arith.constant 0 : index
    %90 = vector.load %arg3[%c0_41, %c2, %c0_42, %c0_43] : memref<1x3x8x256xf32, #tpu.memory_space<vmem>>, vector<1x1x8x256xf32>
    %91 = vector.shape_cast %90 : vector<1x1x8x256xf32> to vector<8x256xf32>
    %cst_44 = arith.constant 5.000000e-01 : f32
    %92 = vector.broadcast %cst_44 : f32 to vector<8x256xf32>
    %93 = arith.mulf %91, %92 : vector<8x256xf32>
    %94 = math.tanh %93 : vector<8x256xf32>
    %cst_45 = arith.constant 5.000000e-01 : f32
    %95 = vector.broadcast %cst_45 : f32 to vector<8x256xf32>
    %96 = arith.mulf %94, %95 : vector<8x256xf32>
    %cst_46 = arith.constant 5.000000e-01 : f32
    %97 = vector.broadcast %cst_46 : f32 to vector<8x256xf32>
    %98 = arith.addf %96, %97 : vector<8x256xf32>
    %99 = vector.broadcast %89 : vector<8x1xf32> to vector<8x256xf32>
    %100 = arith.mulf %98, %99 : vector<8x256xf32>
    %101 = vector.broadcast %9 : vector<8x1xf32> to vector<8x256xf32>
    %102 = arith.addf %101, %100 : vector<8x256xf32>
    %103 = arith.mulf %98, %102 : vector<8x256xf32>
    %104 = arith.addf %103, %26 : vector<8x256xf32>
    %c0_47 = arith.constant 0 : index
    %c2_48 = arith.constant 2 : index
    %c0_49 = arith.constant 0 : index
    %c0_50 = arith.constant 0 : index
    %105 = vector.load %arg4[%c0_47, %c2_48, %c0_49, %c0_50] : memref<1x3x8x256xf32, #tpu.memory_space<vmem>>, vector<1x1x8x256xf32>
    %106 = vector.shape_cast %105 : vector<1x1x8x256xf32> to vector<8x256xf32>
    %107 = vector.shape_cast %104 : vector<8x256xf32> to vector<1x1x8x256xf32>
    tpu.vector_store %arg4[%c0_47, %c2_48, %c0_49, %c0_50], %107 {strides = array<i32>} : memref<1x3x8x256xf32, #tpu.memory_space<vmem>>, vector<1x1x8x256xf32>,
    return
  }
  func.func @transform_0(%arg0: i32, %arg1: i32) -> (i32, i32) {
    %c0_i32 = arith.constant 0 : i32
    %c0_i32_0 = arith.constant 0 : i32
    return %c0_i32, %arg1 : i32, i32
  }
  func.func @transform_1(%arg0: i32, %arg1: i32) -> (i32, i32, i32, i32) {
    %c0_i32 = arith.constant 0 : i32
    %c0_i32_0 = arith.constant 0 : i32
    %c0_i32_1 = arith.constant 0 : i32
    return %arg0, %c0_i32, %c0_i32_0, %arg1 : i32, i32, i32, i32
  }
  func.func @transform_2(%arg0: i32, %arg1: i32) -> (i32, i32, i32, i32) {
    %c0_i32 = arith.constant 0 : i32
    %c0_i32_0 = arith.constant 0 : i32
    %c0_i32_1 = arith.constant 0 : i32
    return %arg0, %c0_i32, %c0_i32_0, %arg1 : i32, i32, i32, i32
  }
}

</mosaic_0001>

<llo_original>
// kernel: yolo_forward.1
$region0: #{yolo_forward.1}
  #allocation0 [shape = 'u32[]', space=smem, size = 0x4, offset = 0x4, fixed_abs, tag = 'smem constant byte address 0x4 - core index']
  #allocation1 [shape = 'u32[72,128]{1,0:T(1,128)}', space=vmem, size = 0x9000, scoped, tag = 'internal scratch']
  %s0 = inlined_call_operand.vmem [shape: f32[2,256], index: 0, kind: input, shape index: {}]
  %s1 = inlined_call_operand.vmem [shape: f32[2,3,8,256], index: 1, kind: input, shape index: {}]
  %s2 = inlined_call_operand.vmem [shape: f32[2,3,8,256], index: 2, kind: output, shape index: {}]
  %s3 = sld [smem:[#allocation0]]
  $region41: #{yolo_forward.1} parent=0
    _
  %s5 = ssub.s32 1, %s3
  %s6 = scalar_select 0, %s5, %s3
  loop: start=0, step=1, limit=4
  $region2: #{yolo_forward.1} parent=0 // loop_pre_header
    _
  $region3: #{yolo_forward.1} parent=0 // loop_header
    %s8 = sphi 0, %s12
    %p9 = scmp.ge.s32.totalorder %s8, 4
    %s15 = sphi 0, %s27
    %s16 = sphi 0, %s23
    %s17 = sphi 0, %s15
    %s18 = sphi 0, %s16
    %s19 = sphi 0, %s17
    %s20 = sphi 0, %s18
    %s30 = sphi 0, %s32
    %s33 = sphi 0, %s30
    %s34 = sphi 0, %s33
    %s50 = sphi 0, %s34
    %s58 = sphi 0, %s60
    %s61 = sphi 0, %s58
    %s62 = sphi 0, %s61
    %s78 = sphi 0, %s62
    %s86 = sphi 0, %s88
    %s89 = sphi 0, %s86
    %s90 = sphi 0, %s89
    %s106 = sphi 0, %s90
  $region4: #{yolo_forward.1} parent=0 // loop_header_branch
    %11 = sbr.rel (%p9) target = $region8
  $region5: #{yolo_forward.1} parent=0 // loop_body
    %s13 = ssub.s32 %s8, 1
    %s14 = ssub.s32 %s8, 2
    %s21 = sadd.s32 1, %s16
    %p22 = scmp.ge.s32.totalorder %s21, 1
    %s23 = scalar_select %p22, 0, %s21
    %s24 = sadd.s32 1, %s15
    %s25 = scalar_select %p22, %s24, %s15
    %p26 = scmp.ge.s32.totalorder %s25, 2
    %s27 = scalar_select %p26, 0, %s25
    %s28 = ssub.s32 %s16, %s23
    %p29 = scmp.eq.s32.totalorder %s28, 0
    %s31 = sadd.s32 %s30, 1
    %s32 = scalar_select %p29, %s30, %s31
    %p35 = pneg %p29
    %p36 = scmp.eq.s32.totalorder %s8, 1
    %p37 = por %p35, %p36
    %p38 = scmp.ne.s32.totalorder %s30, %s33
    %p39 = scmp.eq.s32.totalorder %s8, 0
    %p40 = por %p38, %p39
    %p41 = scmp.ne.s32.totalorder %s30, %s33
    %p42 = scmp.eq.s32.totalorder %s13, 1
    %p43 = por %p41, %p42
    %p44 = scmp.ne.s32.totalorder %s33, %s34
    %p45 = scmp.eq.s32.totalorder %s13, 0
    %p46 = por %p44, %p45
    %p47 = scmp.ne.s32.totalorder %s33, %s34
    %p48 = scmp.eq.s32.totalorder %s14, 1
    %p49 = por %p47, %p48
    %p51 = scmp.ne.s32.totalorder %s34, %s50
    %p52 = scmp.eq.s32.totalorder %s14, 0
    %p53 = por %p51, %p52
    %s54 = ssub.s32 %s15, %s27
    %s55 = ssub.s32 %s16, %s23
    %s56 = sor.u32 %s54, %s55
    %p57 = scmp.eq.s32.totalorder %s56, 0
    %s59 = sadd.s32 %s58, 1
    %s60 = scalar_select %p57, %s58, %s59
    %p63 = pneg %p57
    %p64 = scmp.eq.s32.totalorder %s8, 1
    %p65 = por %p63, %p64
    %p66 = scmp.ne.s32.totalorder %s58, %s61
    %p67 = scmp.eq.s32.totalorder %s8, 0
    %p68 = por %p66, %p67
    %p69 = scmp.ne.s32.totalorder %s58, %s61
    %p70 = scmp.eq.s32.totalorder %s13, 1
    %p71 = por %p69, %p70
    %p72 = scmp.ne.s32.totalorder %s61, %s62
    %p73 = scmp.eq.s32.totalorder %s13, 0
    %p74 = por %p72, %p73
    %p75 = scmp.ne.s32.totalorder %s61, %s62
    %p76 = scmp.eq.s32.totalorder %s14, 1
    %p77 = por %p75, %p76
    %p79 = scmp.ne.s32.totalorder %s62, %s78
    %p80 = scmp.eq.s32.totalorder %s14, 0
    %p81 = por %p79, %p80
    %s82 = ssub.s32 %s15, %s27
    %s83 = ssub.s32 %s16, %s23
    %s84 = sor.u32 %s82, %s83
    %p85 = scmp.eq.s32.totalorder %s84, 0
    %s87 = sadd.s32 %s86, 1
    %s88 = scalar_select %p85, %s86, %s87
    %p91 = pneg %p85
    %p92 = scmp.eq.s32.totalorder %s8, 1
    %p93 = por %p91, %p92
    %p94 = scmp.ne.s32.totalorder %s86, %s89
    %p95 = scmp.eq.s32.totalorder %s8, 0
    %p96 = por %p94, %p95
    %p97 = scmp.ne.s32.totalorder %s86, %s89
    %p98 = scmp.eq.s32.totalorder %s13, 1
    %p99 = por %p97, %p98
    %p100 = scmp.ne.s32.totalorder %s89, %s90
    %p101 = scmp.eq.s32.totalorder %s13, 0
    %p102 = por %p100, %p101
    %p103 = scmp.ne.s32.totalorder %s89, %s90
    %p104 = scmp.eq.s32.totalorder %s14, 1
    %p105 = por %p103, %p104
    %p107 = scmp.ne.s32.totalorder %s90, %s106
    %p108 = scmp.eq.s32.totalorder %s14, 0
    %p109 = por %p107, %p108
    %p110 = scmp.le.s32.totalorder 1, %s8
    %p111 = scmp.lt.s32.totalorder %s8, 3
    %p112 = pnand %p110, %p111
    %p113 = pneg %p112
    // Predicated region
    $region9: #{yolo_forward.1} parent=5 // pred_check
      _
    $region10: #{yolo_forward.1} parent=5 // pred_check_branch
      %115 = sbr.rel (%p112) target = $region12
    $region11: #{yolo_forward.1} parent=5 // pred_region
      %s116 = ssub.s32 %s8, 1
      // Predicated region
      $region13: #{yolo_forward.1} parent=11 // pred_check
        %p117 = pneg %p46
      $region14: #{yolo_forward.1} parent=11 // pred_check_branch
        %119 = sbr.rel (%p117) target = $region16
      $region15: #{yolo_forward.1} parent=11 // pred_region
        %s120 = smul.u32 2, %s18
        %p121 = scmp.lt.s32.totalorder %s120, 1
        %s122 = scalar_select %p121, %s120, 1
        %s123 = smul.addr %s122, 2
        %s124 = scalar_lea.vmem %s0, %s123
        %s125 = smul.u32 2, %s18
      $region16: #{yolo_forward.1} parent=11 // pred_fallthru
        _
    $region12: #{yolo_forward.1} parent=5 // pred_fallthru
      _
    %p126 = scmp.lt.s32.totalorder %s8, 2
    // Predicated region
    $region17: #{yolo_forward.1} parent=5 // pred_check
      %p127 = pneg %p126
    $region18: #{yolo_forward.1} parent=5 // pred_check_branch
      %129 = sbr.rel (%p127) target = $region20
    $region19: #{yolo_forward.1} parent=5 // pred_region
      // Predicated region
      $region21: #{yolo_forward.1} parent=19 // pred_check
        %p130 = pneg %p68
      $region22: #{yolo_forward.1} parent=19 // pred_check_branch
        %132 = sbr.rel (%p130) target = $region24
      $region23: #{yolo_forward.1} parent=19 // pred_region
        %s133 = smul.u32 2, %s16
        %p134 = scmp.lt.s32.totalorder %s15, 1
        %s135 = scalar_select %p134, %s15, 1
        %p136 = scmp.lt.s32.totalorder %s133, 1
        %s137 = scalar_select %p136, %s133, 1
        %s138 = smul.addr %s135, 6
        %s139 = sadd.s32 %s137, %s138
        %s140 = smul.addr %s139, 8
        %s141 = scalar_lea.vmem %s1, %s140
        %s142 = smul.u32 2, %s16
      $region24: #{yolo_forward.1} parent=19 // pred_fallthru
        _
    $region20: #{yolo_forward.1} parent=5 // pred_fallthru
      _
    %p143 = scmp.le.s32.totalorder 1, %s8
    %p144 = scmp.lt.s32.totalorder %s8, 3
    %p145 = pnand %p143, %p144
    %p146 = pneg %p145
    // Predicated region
    $region25: #{yolo_forward.1} parent=5 // pred_check
      _
    $region26: #{yolo_forward.1} parent=5 // pred_check_branch
      %148 = sbr.rel (%p145) target = $region28
    $region27: #{yolo_forward.1} parent=5 // pred_region
      %s149 = ssub.s32 %s8, 1
      %s150 = smul.u32 2, %s18
      %p151 = scmp.lt.s32.totalorder %s150, 1
      %s152 = scalar_select %p151, %s150, 1
      %s153 = smul.addr %s152, 2
      %s154 = scalar_lea.vmem %s0, %s153
      %p155 = pneg %p46
      %p156 = pneg %p43
      %s157 = smul.u32 2, %s18
      %p158 = scmp.lt.s32.totalorder %s17, 1
      %s159 = scalar_select %p158, %s17, 1
      %p160 = scmp.lt.s32.totalorder %s157, 1
      %s161 = scalar_select %p160, %s157, 1
      %s162 = smul.addr %s159, 6
      %s163 = sadd.s32 %s161, %s162
      %s164 = smul.addr %s163, 8
      %s165 = scalar_lea.vmem %s1, %s164
      %p166 = pneg %p74
      %p167 = pneg %p71
      %p168 = pneg %p102
      %p169 = pneg %p99
      %s170 = smul.u32 2, %s18
      %p171 = scmp.lt.s32.totalorder %s17, 1
      %s172 = scalar_select %p171, %s17, 1
      %p173 = scmp.lt.s32.totalorder %s170, 1
      %s174 = scalar_select %p173, %s170, 1
      %s175 = smul.addr %s172, 6
      %s176 = sadd.s32 %s174, %s175
      %s177 = smul.addr %s176, 8
      %s178 = scalar_lea.vmem %s2, %s177
      %s179 = smul.u32 2, %s18
      %p180 = scmp.lt.s32.totalorder %s179, 1
      %s181 = scalar_select %p180, %s179, 1
      %s182 = smul.addr %s181, 2
      %s183 = scalar_lea.vmem %s0, %s182
      %s184 = smul.u32 2, %s18
      %s185 = smul.u32 2, %s18
      %p186 = scmp.lt.s32.totalorder %s17, 1
      %s187 = scalar_select %p186, %s17, 1
      %p188 = scmp.lt.s32.totalorder %s185, 1
      %s189 = scalar_select %p188, %s185, 1
      %s190 = smul.addr %s187, 6
      %s191 = sadd.s32 %s189, %s190
      %s192 = smul.addr %s191, 8
      %s193 = scalar_lea.vmem %s1, %s192
      %s194 = smul.u32 2, %s18
      %s195 = smul.u32 2, %s18
      %p196 = scmp.lt.s32.totalorder %s17, 1
      %s197 = scalar_select %p196, %s17, 1
      %p198 = scmp.lt.s32.totalorder %s195, 1
      %s199 = scalar_select %p198, %s195, 1
      %s200 = smul.addr %s197, 6
      %s201 = sadd.s32 %s199, %s200
      %s202 = smul.addr %s201, 8
      %s203 = scalar_lea.vmem %s2, %s202
      %s204 = smul.u32 2, %s18
      %v205 = vlaneseq
      %v206 = vshrl.u32 %v205, 7
      %vm207 = vcmp.lt.s32.totalorder %v206, 2
      %vm208 = vcmp.lt.s32.totalorder %v206, 4
      %v209 = vsel %vm208, 0.0, 1.0
      %v210 = vsel %vm207, 16.0, %v209
      %vm211 = vcmp.eq.s32.totalorder %v206, 0
      %v212 = vld [vmem:[%s183] ss:$2 sm:$0x3]
      %vm213 = vcmp.eq.s32.totalorder %v206, 1
      %s214 = scalar_lea.vmem %s183, 1
      %v215 = vld [vmem:[%s214] ss:$2 sm:$0x3]
      %v216 = vsel %vm213, 1, 0
      %vm217 = vcmp.eq.s32.totalorder %v216, 1
      %v219 = vperm.slane %v215, 0
      %v220 = vperm.slane %v215, 1
      %v223 = vsel %vm217, %v219, 0.0
      %v224 = vsel %vm217, %v220, 0.0
      %v225 = vsel %vm211, 1, 0
      %vm226 = vcmp.eq.s32.totalorder %v225, 1
      %v228 = vperm.slane %v212, 0
      %v229 = vperm.slane %v212, 1
      %v232 = vsel %vm226, %v228, %v223
      %v233 = vsel %vm226, %v229, %v224
      %vm234 = vcmp.eq.s32.totalorder %v206, 2
      %vm235 = vcmp.eq.s32.totalorder %v206, 3
      %v236 = vsel %vm235, 52.0, 0.0
      %v237 = vsel %vm234, 40.0, %v236
      %v238 = vld [vmem:[%s193] sm:$0xff]
      %v239 = vld [vmem:[%s193 + $0x8] sm:$0xff]
      %v240 = vmul.f32 %v238, 0.5
      %v241 = vmul.f32 %v239, 0.5
      %v242 = vtanh.pop %v240
      %v243 = vtanh.pop %v241
      %v244 = vmul.f32 %v242, 0.5
      %v245 = vmul.f32 %v243, 0.5
      %v246 = vadd.f32 %v244, 0.5
      %v247 = vadd.f32 %v245, 0.5
      %v248 = vmul.f32 %v246, %v237
      %v249 = vmul.f32 %v247, %v237
      %v250 = vadd.f32 %v210, %v248
      %v251 = vadd.f32 %v210, %v249
      %v252 = vmul.f32 %v246, %v250
      %v253 = vmul.f32 %v247, %v251
      %v254 = vadd.f32 %v252, %v232
      %v255 = vadd.f32 %v253, %v233
      %256 = vst [vmem:[%s203] sm:$0xff] %v254
      %257 = vst [vmem:[%s203 + $0x8] sm:$0xff] %v255
      %v258 = vsel %vm235, 120.0, 0.0
      %v259 = vsel %vm234, 64.0, %v258
      %s260 = scalar_lea.vmem %s193, 16
      %v261 = vld [vmem:[%s260] sm:$0xff]
      %v262 = vld [vmem:[%s260 + $0x8] sm:$0xff]
      %v263 = vmul.f32 %v261, 0.5
      %v264 = vmul.f32 %v262, 0.5
      %v265 = vtanh.pop %v263
      %v266 = vtanh.pop %v264
      %v267 = vmul.f32 %v265, 0.5
      %v268 = vmul.f32 %v266, 0.5
      %v269 = vadd.f32 %v267, 0.5
      %v270 = vadd.f32 %v268, 0.5
      %v271 = vmul.f32 %v269, %v259
      %v272 = vmul.f32 %v270, %v259
      %v273 = vadd.f32 %v210, %v271
      %v274 = vadd.f32 %v210, %v272
      %v275 = vmul.f32 %v269, %v273
      %v276 = vmul.f32 %v270, %v274
      %v277 = vadd.f32 %v275, %v232
      %v278 = vadd.f32 %v276, %v233
      %s279 = scalar_lea.vmem %s203, 16
      %280 = vst [vmem:[%s279] sm:$0xff] %v277
      %281 = vst [vmem:[%s279 + $0x8] sm:$0xff] %v278
      %v282 = vsel %vm235, 92.0, 0.0
      %v283 = vsel %vm234, 132.0, %v282
      %s284 = scalar_lea.vmem %s193, 32
      %v285 = vld [vmem:[%s284] sm:$0xff]
      %v286 = vld [vmem:[%s284 + $0x8] sm:$0xff]
      %v287 = vmul.f32 %v285, 0.5
      %v288 = vmul.f32 %v286, 0.5
      %v289 = vtanh.pop %v287
      %v290 = vtanh.pop %v288
      %v291 = vmul.f32 %v289, 0.5
      %v292 = vmul.f32 %v290, 0.5
      %v293 = vadd.f32 %v291, 0.5
      %v294 = vadd.f32 %v292, 0.5
      %v295 = vmul.f32 %v293, %v283
      %v296 = vmul.f32 %v294, %v283
      %v297 = vadd.f32 %v210, %v295
      %v298 = vadd.f32 %v210, %v296
      %v299 = vmul.f32 %v293, %v297
      %v300 = vmul.f32 %v294, %v298
      %v301 = vadd.f32 %v299, %v232
      %v302 = vadd.f32 %v300, %v233
      %s303 = scalar_lea.vmem %s203, 32
      %304 = vst [vmem:[%s303] sm:$0xff] %v301
      %305 = vst [vmem:[%s303 + $0x8] sm:$0xff] %v302
      %s306 = smul.u32 2, %s18
      %p307 = scmp.lt.s32.totalorder %s17, 1
      %s308 = scalar_select %p307, %s17, 1
      %p309 = scmp.lt.s32.totalorder %s306, 1
      %s310 = scalar_select %p309, %s306, 1
      %s311 = smul.addr %s308, 6
      %s312 = sadd.s32 %s310, %s311
      %s313 = smul.addr %s312, 8
      %s314 = scalar_lea.vmem %s2, %s313
      // Predicated region
      $region29: #{yolo_forward.1} parent=27 // pred_check
        %p315 = pneg %p99
      $region30: #{yolo_forward.1} parent=27 // pred_check_branch
        %317 = sbr.rel (%p315) target = $region32
      $region31: #{yolo_forward.1} parent=27 // pred_region
        %s318 = smul.u32 2, %s18
      $region32: #{yolo_forward.1} parent=27 // pred_fallthru
        _
    $region28: #{yolo_forward.1} parent=5 // pred_fallthru
      _
    %p319 = scmp.le.s32.totalorder 2, %s8
    // Predicated region
    $region33: #{yolo_forward.1} parent=5 // pred_check
      %p320 = pneg %p319
    $region34: #{yolo_forward.1} parent=5 // pred_check_branch
      %322 = sbr.rel (%p320) target = $region36
    $region35: #{yolo_forward.1} parent=5 // pred_region
      %s323 = ssub.s32 %s8, 2
      // Predicated region
      $region37: #{yolo_forward.1} parent=35 // pred_check
        %p324 = pneg %p105
      $region38: #{yolo_forward.1} parent=35 // pred_check_branch
        %326 = sbr.rel (%p324) target = $region40
      $region39: #{yolo_forward.1} parent=35 // pred_region
        %s327 = smul.u32 2, %s20
        %p328 = scmp.lt.s32.totalorder %s19, 1
        %s329 = scalar_select %p328, %s19, 1
        %p330 = scmp.lt.s32.totalorder %s327, 1
        %s331 = scalar_select %p330, %s327, 1
        %s332 = smul.addr %s329, 6
        %s333 = sadd.s32 %s331, %s332
        %s334 = smul.addr %s333, 8
        %s335 = scalar_lea.vmem %s2, %s334
      $region40: #{yolo_forward.1} parent=35 // pred_fallthru
        _
    $region36: #{yolo_forward.1} parent=5 // pred_fallthru
      _
  $region6: #{yolo_forward.1} parent=0 // loop_footer
    %s12 = sadd.s32 1, %s8
  $region7: #{yolo_forward.1} parent=0 // loop_footer_branch
    %7 = sbr.rel target = $region3
  $region8: #{yolo_forward.1} parent=0 // loop_exit
    _

</llo_original>
